<compile_context>
chip_gen: v5e
topology: v5e:2x2
jax: 0.10.0
libtpu: 0.0.40
codegen_flags: <defaults>
</compile_context>

<pallas_src>
import math
import jax
import jax.numpy as jnp
from jax import lax
from jax.experimental import pallas as pl
from jax.experimental.pallas import tpu as pltpu

# ---------------- config (small, consistent with the module) ----------------
B = 2          # batch
T = 8          # sequence length
C = 32         # n_embd
N_HEAD = 4
HEAD_DIM = C // N_HEAD
EPS = 1e-5


# ---------------- wrapper + kernel ----------------
def transformer_block(x, mask, params):
    """x: (B, T, C) float32; mask: (T, T) float32 (1 = keep, 0 = masked)."""
    Bb, Tt, Cc = x.shape
    H = N_HEAD
    D = Cc // H
    BT = Bb * Tt
    scale = 1.0 / math.sqrt(D)

    # ---- wrapper-side prep (plain XLA ops, free w.r.t. the kernel) ----
    # Fold the 1/sqrt(D) score scale into the Q columns of the fused qkv weight/bias.
    col_scale = jnp.concatenate([jnp.full((Cc,), scale, jnp.float32),
                                 jnp.ones((2 * Cc,), jnp.float32)])
    wqkv = (params["wqkv"] * col_scale[None, :]).astype(jnp.bfloat16)     # (C, 3C) bf16
    bqkv = params["bqkv"] * col_scale[None, :]                            # (1, 3C) f32

    wproj = params["wproj"].astype(jnp.bfloat16)                          # (C, C)  bf16
    w1 = params["w1"].astype(jnp.bfloat16)                                # (C, 4C) bf16
    w2 = params["w2"].astype(jnp.bfloat16)                                # (4C, C) bf16

    # Additive mask bias precomputed once in the wrapper (no in-kernel where/select).
    mask_bias = jnp.where(mask == 0.0, jnp.float32(-1e30), jnp.float32(0.0))  # (T, T)

    # Pack all small per-channel vectors into ONE (8, 4C) slab -> single DMA,
    # single (8,128)-padded VMEM tile instead of 8 separate tiny inputs.
    def pad_row(v):
        return jnp.pad(v, ((0, 0), (0, 4 * Cc - v.shape[1])))
    slab = jnp.concatenate(
        [pad_row(params["g1"]),    # row 0
         pad_row(params["b1"]),    # row 1
         pad_row(bqkv),            # row 2 (scaled qkv bias, first 3C lanes)
         pad_row(params["bproj"]), # row 3
         pad_row(params["g2"]),    # row 4
         pad_row(params["b2"]),    # row 5
         params["bm1"],            # row 6 (exactly 4C lanes)
         pad_row(params["bm2"])],  # row 7
        axis=0).astype(jnp.float32)                                       # (8, 4C)

    x2 = x.reshape(BT, Cc)   # fuse batch & sequence into the matmul M dimension

    def kernel(x_ref, bias_ref, vec_ref, wqkv_ref, wproj_ref, w1_ref, w2_ref, out_ref):
        xv = x_ref[...]                                                   # (BT, C) f32

        slab_v = vec_ref[...]                                             # (8, 4C) f32
        g1 = slab_v[0:1, :Cc]
        b1 = slab_v[1:2, :Cc]
        bqkv_v = slab_v[2:3, :3 * Cc]
        bproj = slab_v[3:4, :Cc]
        g2 = slab_v[4:5, :Cc]
        b2 = slab_v[5:6, :Cc]
        bm1 = slab_v[6:7, :]                                              # (1, 4C)
        bm2 = slab_v[7:8, :Cc]

        def layernorm(v, g, b):
            mu = jnp.mean(v, axis=-1, keepdims=True)
            var = jnp.mean((v - mu) * (v - mu), axis=-1, keepdims=True)
            return (v - mu) * lax.rsqrt(var + EPS) * g + b

        # ---------------- attention branch ----------------
        h = layernorm(xv, g1, b1)                                         # (BT, C) f32

        # ONE fused QKV matmul (bf16 operands, f32 accumulate); scale already folded in.
        qkv = jnp.dot(h.astype(jnp.bfloat16), wqkv_ref[...],
                      preferred_element_type=jnp.float32) + bqkv_v        # (BT, 3C) f32

        # mask bias broadcast ONCE (hoisted out of the unrolled head loop)
        bias_b = jnp.broadcast_to(bias_ref[...][None, :, :], (Bb, Tt, Tt))

        head_outs = []
        for hd in range(H):   # static head loop; D-aligned static lane slices of fused qkv
            qh = qkv[:, hd * D:(hd + 1) * D].reshape(Bb, Tt, D).astype(jnp.bfloat16)
            kh = qkv[:, Cc + hd * D:Cc + (hd + 1) * D].reshape(Bb, Tt, D).astype(jnp.bfloat16)
            vh = qkv[:, 2 * Cc + hd * D:2 * Cc + (hd + 1) * D].reshape(Bb, Tt, D).astype(jnp.bfloat16)

            s = jnp.einsum('btd,bsd->bts', qh, kh,
                           preferred_element_type=jnp.float32) + bias_b   # (B, T, T) f32
            s = s - jnp.max(s, axis=-1, keepdims=True)
            p = jnp.exp(s)
            p = p * pl.reciprocal(jnp.sum(p, axis=-1, keepdims=True), approx=True)

            o = jnp.einsum('bts,bsd->btd', p.astype(jnp.bfloat16), vh,
                           preferred_element_type=jnp.float32)            # (B, T, D) f32
            head_outs.append(o.reshape(BT, D))

        # head-concat -> single (BT,C)@(C,C) output-projection dot (one MXU push)
        o_cat = jnp.concatenate(head_outs, axis=-1)                       # (BT, C)
        attn = jnp.dot(o_cat.astype(jnp.bfloat16), wproj_ref[...],
                       preferred_element_type=jnp.float32) + bproj        # (BT, C)

        xr = xv + attn                                                    # residual 1

        # ---------------- MLP branch ----------------
        h2 = layernorm(xr, g2, b2)                                        # (BT, C)
        m = jnp.dot(h2.astype(jnp.bfloat16), w1_ref[...],
                    preferred_element_type=jnp.float32) + bm1             # (BT, 4C)
        m = 0.5 * m * (1.0 + lax.erf(m * (1.0 / math.sqrt(2.0))))         # exact GELU
        m = jnp.dot(m.astype(jnp.bfloat16), w2_ref[...],
                    preferred_element_type=jnp.float32) + bm2             # (BT, C)
        # TODO(synk): dropout omitted (inference mode / applied as identity)
        out_ref[...] = (xr + m).astype(out_ref.dtype)                     # residual 2
        # NOTE: out last dim is 32 (< 128 lanes -> masked stores); keep C a
        # multiple of 128 (or reshape to a lane-dense slab) when scaling up.

    vmem = pl.BlockSpec(memory_space=pltpu.MemorySpace.VMEM)
    out2 = pl.pallas_call(
        kernel,
        out_shape=jax.ShapeDtypeStruct((BT, Cc), x.dtype),
        in_specs=[vmem] * 7,
        out_specs=vmem,
    )(x2, mask_bias, slab, wqkv, wproj, w1, w2)

    return out2.reshape(Bb, Tt, Cc)


# ---------------- deterministic parameter init ----------------
def init_params(key):
    ks = jax.random.split(key, 8)
    s = 0.02
    return {
        "g1":    jnp.ones((1, C), jnp.float32),
        "b1":    jnp.zeros((1, C), jnp.float32),
        "wqkv":  s * jax.random.normal(ks[0], (C, 3 * C), jnp.float32),
        "bqkv":  jnp.zeros((1, 3 * C), jnp.float32),
        "wproj": s * jax.random.normal(ks[1], (C, C), jnp.float32),
        "bproj": jnp.zeros((1, C), jnp.float32),
        "g2":    jnp.ones((1, C), jnp.float32),
        "b2":    jnp.zeros((1, C), jnp.float32),
        "w1":    s * jax.random.normal(ks[2], (C, 4 * C), jnp.float32),
        "bm1":   jnp.zeros((1, 4 * C), jnp.float32),
        "w2":    s * jax.random.normal(ks[3], (4 * C, C), jnp.float32),
        "bm2":   jnp.zeros((1, C), jnp.float32),
    }


if __name__ == "__main__":
    key = jax.random.PRNGKey(0)
    kx, kp = jax.random.split(key)

    x = jax.random.normal(kx, (B, T, C), jnp.float32)
    # causal mask: 1 where attention allowed (lower triangle), 0 elsewhere
    mask = jnp.tril(jnp.ones((T, T), jnp.float32))

    params = init_params(kp)

    out = transformer_block(x, mask, params)
    jax.block_until_ready(out)
    assert out.shape == (B, T, C)
    print("KERNEL_OK")
</pallas_src>

<mosaic_0001>
module attributes {stable_mosaic.version = 11 : i64} {
  func.func @kernel(%arg0: memref<16x32xf32, #tpu.memory_space<vmem>>, %arg1: memref<8x8xf32, #tpu.memory_space<vmem>>, %arg2: memref<8x128xf32, #tpu.memory_space<vmem>>, %arg3: memref<32x96xbf16, #tpu.memory_space<vmem>>, %arg4: memref<32x32xbf16, #tpu.memory_space<vmem>>, %arg5: memref<32x128xbf16, #tpu.memory_space<vmem>>, %arg6: memref<128x32xbf16, #tpu.memory_space<vmem>>, %arg7: memref<16x32xf32, #tpu.memory_space<vmem>>) attributes {dimension_semantics = [], scalar_prefetch = 0 : i64, scratch_operands = 0 : i64, tpu.core_type = #tpu.core_type<tc>} {
    %c0 = arith.constant 0 : index
    %c0_0 = arith.constant 0 : index
    %0 = vector.load %arg0[%c0, %c0_0] : memref<16x32xf32, #tpu.memory_space<vmem>>, vector<16x32xf32>
    %c0_1 = arith.constant 0 : index
    %c0_2 = arith.constant 0 : index
    %1 = vector.load %arg2[%c0_1, %c0_2] : memref<8x128xf32, #tpu.memory_space<vmem>>, vector<8x128xf32>
    %2 = vector.extract_strided_slice %1 {offsets = [0, 0], sizes = [1, 32], strides = [1, 1]} : vector<8x128xf32> to vector<1x32xf32>
    %3 = vector.extract_strided_slice %1 {offsets = [1, 0], sizes = [1, 32], strides = [1, 1]} : vector<8x128xf32> to vector<1x32xf32>
    %4 = vector.extract_strided_slice %1 {offsets = [2, 0], sizes = [1, 96], strides = [1, 1]} : vector<8x128xf32> to vector<1x96xf32>
    %5 = vector.extract_strided_slice %1 {offsets = [3, 0], sizes = [1, 32], strides = [1, 1]} : vector<8x128xf32> to vector<1x32xf32>
    %6 = vector.extract_strided_slice %1 {offsets = [4, 0], sizes = [1, 32], strides = [1, 1]} : vector<8x128xf32> to vector<1x32xf32>
    %7 = vector.extract_strided_slice %1 {offsets = [5, 0], sizes = [1, 32], strides = [1, 1]} : vector<8x128xf32> to vector<1x32xf32>
    %8 = vector.extract_strided_slice %1 {offsets = [6, 0], sizes = [1, 128], strides = [1, 1]} : vector<8x128xf32> to vector<1x128xf32>
    %9 = vector.extract_strided_slice %1 {offsets = [7, 0], sizes = [1, 32], strides = [1, 1]} : vector<8x128xf32> to vector<1x32xf32>
    %cst = arith.constant dense<0.000000e+00> : vector<16xf32>
    %10 = vector.multi_reduction <add>, %0, %cst [1] : vector<16x32xf32> to vector<16xf32>
    %11 = vector.shape_cast %10 : vector<16xf32> to vector<16x1xf32>
    %cst_3 = arith.constant 3.200000e+01 : f32
    %12 = vector.broadcast %cst_3 : f32 to vector<16x1xf32>
    %13 = arith.divf %11, %12 : vector<16x1xf32>
    %14 = vector.broadcast %13 : vector<16x1xf32> to vector<16x32xf32>
    %15 = arith.subf %0, %14 : vector<16x32xf32>
    %16 = vector.broadcast %13 : vector<16x1xf32> to vector<16x32xf32>
    %17 = arith.subf %0, %16 : vector<16x32xf32>
    %18 = arith.mulf %15, %17 : vector<16x32xf32>
    %cst_4 = arith.constant dense<0.000000e+00> : vector<16xf32>
    %19 = vector.multi_reduction <add>, %18, %cst_4 [1] : vector<16x32xf32> to vector<16xf32>
    %20 = vector.shape_cast %19 : vector<16xf32> to vector<16x1xf32>
    %cst_5 = arith.constant 3.200000e+01 : f32
    %21 = vector.broadcast %cst_5 : f32 to vector<16x1xf32>
    %22 = arith.divf %20, %21 : vector<16x1xf32>
    %23 = vector.broadcast %13 : vector<16x1xf32> to vector<16x32xf32>
    %24 = arith.subf %0, %23 : vector<16x32xf32>
    %cst_6 = arith.constant 9.99999974E-6 : f32
    %25 = vector.broadcast %cst_6 : f32 to vector<16x1xf32>
    %26 = arith.addf %22, %25 : vector<16x1xf32>
    %27 = math.rsqrt %26 : vector<16x1xf32>
    %28 = vector.broadcast %27 : vector<16x1xf32> to vector<16x32xf32>
    %29 = arith.mulf %24, %28 : vector<16x32xf32>
    %30 = vector.broadcast %2 : vector<1x32xf32> to vector<16x32xf32>
    %31 = arith.mulf %29, %30 : vector<16x32xf32>
    %32 = vector.broadcast %3 : vector<1x32xf32> to vector<16x32xf32>
    %33 = arith.addf %31, %32 : vector<16x32xf32>
    %34 = arith.truncf %33 : vector<16x32xf32> to vector<16x32xbf16>
    %c0_7 = arith.constant 0 : index
    %c0_8 = arith.constant 0 : index
    %35 = vector.load %arg3[%c0_7, %c0_8] : memref<32x96xbf16, #tpu.memory_space<vmem>>, vector<32x96xbf16>
    %cst_9 = arith.constant dense<0.000000e+00> : vector<16x96xf32>
    %36 = tpu.matmul %34, %35, %cst_9 {dimension_numbers = #tpu.dot_dimension_numbers<[1], [0], [0], [1], [0, 0, 1, 1], [], []>} : vector<16x32xbf16>, vector<32x96xbf16>, vector<16x96xf32> -> vector<16x96xf32>
    %37 = vector.broadcast %4 : vector<1x96xf32> to vector<16x96xf32>
    %38 = arith.addf %36, %37 : vector<16x96xf32>
    %c0_10 = arith.constant 0 : index
    %c0_11 = arith.constant 0 : index
    %39 = vector.load %arg1[%c0_10, %c0_11] : memref<8x8xf32, #tpu.memory_space<vmem>>, vector<8x8xf32>
    %40 = vector.shape_cast %39 : vector<8x8xf32> to vector<1x8x8xf32>
    %41 = vector.shape_cast %40 : vector<1x8x8xf32> to vector<1x8x8xf32>
    %42 = vector.broadcast %41 : vector<1x8x8xf32> to vector<2x8x8xf32>
    %43 = vector.extract_strided_slice %38 {offsets = [0, 0], sizes = [16, 8], strides = [1, 1]} : vector<16x96xf32> to vector<16x8xf32>
    %44 = vector.shape_cast %43 : vector<16x8xf32> to vector<2x8x8xf32>
    %45 = arith.truncf %44 : vector<2x8x8xf32> to vector<2x8x8xbf16>
    %46 = vector.extract_strided_slice %38 {offsets = [0, 32], sizes = [16, 8], strides = [1, 1]} : vector<16x96xf32> to vector<16x8xf32>
    %47 = vector.shape_cast %46 : vector<16x8xf32> to vector<2x8x8xf32>
    %48 = arith.truncf %47 : vector<2x8x8xf32> to vector<2x8x8xbf16>
    %49 = vector.extract_strided_slice %38 {offsets = [0, 64], sizes = [16, 8], strides = [1, 1]} : vector<16x96xf32> to vector<16x8xf32>
    %50 = vector.shape_cast %49 : vector<16x8xf32> to vector<2x8x8xf32>
    %51 = arith.truncf %50 : vector<2x8x8xf32> to vector<2x8x8xbf16>
    "tpu.trace_start"() <{level = 10 : i32, message = "btd,bsd->bts"}> : () -> ()
    %cst_12 = arith.constant dense<0.000000e+00> : vector<2x8x8xf32>
    %52 = tpu.matmul %45, %48, %cst_12 {dimension_numbers = #tpu.dot_dimension_numbers<[2], [2], [1], [1], [0, 0, 0, 1, 1, 1], [0], [0]>} : vector<2x8x8xbf16>, vector<2x8x8xbf16>, vector<2x8x8xf32> -> vector<2x8x8xf32>
    "tpu.trace_stop"() : () -> ()
    %53 = arith.addf %52, %42 : vector<2x8x8xf32>
    %cst_13 = arith.constant dense<0xFF800000> : vector<2x8xf32>
    %54 = vector.multi_reduction <maximumf>, %53, %cst_13 [2] : vector<2x8x8xf32> to vector<2x8xf32>
    %55 = vector.shape_cast %54 : vector<2x8xf32> to vector<2x8x1xf32>
    %56 = vector.broadcast %55 : vector<2x8x1xf32> to vector<2x8x8xf32>
    %57 = arith.subf %53, %56 : vector<2x8x8xf32>
    %58 = math.exp %57 : vector<2x8x8xf32>
    %cst_14 = arith.constant dense<0.000000e+00> : vector<2x8xf32>
    %59 = vector.multi_reduction <add>, %58, %cst_14 [2] : vector<2x8x8xf32> to vector<2x8xf32>
    %60 = vector.shape_cast %59 : vector<2x8xf32> to vector<2x8x1xf32>
    %61 = tpu.reciprocal %60 {approx = true} : vector<2x8x1xf32> -> vector<2x8x1xf32>
    %62 = vector.broadcast %61 : vector<2x8x1xf32> to vector<2x8x8xf32>
    %63 = arith.mulf %58, %62 : vector<2x8x8xf32>
    %64 = arith.truncf %63 : vector<2x8x8xf32> to vector<2x8x8xbf16>
    "tpu.trace_start"() <{level = 10 : i32, message = "bts,bsd->btd"}> : () -> ()
    %cst_15 = arith.constant dense<0.000000e+00> : vector<2x8x8xf32>
    %65 = tpu.matmul %64, %51, %cst_15 {dimension_numbers = #tpu.dot_dimension_numbers<[2], [1], [1], [2], [0, 0, 0, 1, 1, 2], [0], [0]>} : vector<2x8x8xbf16>, vector<2x8x8xbf16>, vector<2x8x8xf32> -> vector<2x8x8xf32>
    "tpu.trace_stop"() : () -> ()
    %66 = vector.shape_cast %65 : vector<2x8x8xf32> to vector<16x8xf32>
    %67 = vector.extract_strided_slice %38 {offsets = [0, 8], sizes = [16, 8], strides = [1, 1]} : vector<16x96xf32> to vector<16x8xf32>
    %68 = vector.shape_cast %67 : vector<16x8xf32> to vector<2x8x8xf32>
    %69 = arith.truncf %68 : vector<2x8x8xf32> to vector<2x8x8xbf16>
    %70 = vector.extract_strided_slice %38 {offsets = [0, 40], sizes = [16, 8], strides = [1, 1]} : vector<16x96xf32> to vector<16x8xf32>
    %71 = vector.shape_cast %70 : vector<16x8xf32> to vector<2x8x8xf32>
    %72 = arith.truncf %71 : vector<2x8x8xf32> to vector<2x8x8xbf16>
    %73 = vector.extract_strided_slice %38 {offsets = [0, 72], sizes = [16, 8], strides = [1, 1]} : vector<16x96xf32> to vector<16x8xf32>
    %74 = vector.shape_cast %73 : vector<16x8xf32> to vector<2x8x8xf32>
    %75 = arith.truncf %74 : vector<2x8x8xf32> to vector<2x8x8xbf16>
    "tpu.trace_start"() <{level = 10 : i32, message = "btd,bsd->bts"}> : () -> ()
    %cst_16 = arith.constant dense<0.000000e+00> : vector<2x8x8xf32>
    %76 = tpu.matmul %69, %72, %cst_16 {dimension_numbers = #tpu.dot_dimension_numbers<[2], [2], [1], [1], [0, 0, 0, 1, 1, 1], [0], [0]>} : vector<2x8x8xbf16>, vector<2x8x8xbf16>, vector<2x8x8xf32> -> vector<2x8x8xf32>
    "tpu.trace_stop"() : () -> ()
    %77 = arith.addf %76, %42 : vector<2x8x8xf32>
    %cst_17 = arith.constant dense<0xFF800000> : vector<2x8xf32>
    %78 = vector.multi_reduction <maximumf>, %77, %cst_17 [2] : vector<2x8x8xf32> to vector<2x8xf32>
    %79 = vector.shape_cast %78 : vector<2x8xf32> to vector<2x8x1xf32>
    %80 = vector.broadcast %79 : vector<2x8x1xf32> to vector<2x8x8xf32>
    %81 = arith.subf %77, %80 : vector<2x8x8xf32>
    %82 = math.exp %81 : vector<2x8x8xf32>
    %cst_18 = arith.constant dense<0.000000e+00> : vector<2x8xf32>
    %83 = vector.multi_reduction <add>, %82, %cst_18 [2] : vector<2x8x8xf32> to vector<2x8xf32>
    %84 = vector.shape_cast %83 : vector<2x8xf32> to vector<2x8x1xf32>
    %85 = tpu.reciprocal %84 {approx = true} : vector<2x8x1xf32> -> vector<2x8x1xf32>
    %86 = vector.broadcast %85 : vector<2x8x1xf32> to vector<2x8x8xf32>
    %87 = arith.mulf %82, %86 : vector<2x8x8xf32>
    %88 = arith.truncf %87 : vector<2x8x8xf32> to vector<2x8x8xbf16>
    "tpu.trace_start"() <{level = 10 : i32, message = "bts,bsd->btd"}> : () -> ()
    %cst_19 = arith.constant dense<0.000000e+00> : vector<2x8x8xf32>
    %89 = tpu.matmul %88, %75, %cst_19 {dimension_numbers = #tpu.dot_dimension_numbers<[2], [1], [1], [2], [0, 0, 0, 1, 1, 2], [0], [0]>} : vector<2x8x8xbf16>, vector<2x8x8xbf16>, vector<2x8x8xf32> -> vector<2x8x8xf32>
    "tpu.trace_stop"() : () -> ()
    %90 = vector.shape_cast %89 : vector<2x8x8xf32> to vector<16x8xf32>
    %91 = vector.extract_strided_slice %38 {offsets = [0, 16], sizes = [16, 8], strides = [1, 1]} : vector<16x96xf32> to vector<16x8xf32>
    %92 = vector.shape_cast %91 : vector<16x8xf32> to vector<2x8x8xf32>
    %93 = arith.truncf %92 : vector<2x8x8xf32> to vector<2x8x8xbf16>
    %94 = vector.extract_strided_slice %38 {offsets = [0, 48], sizes = [16, 8], strides = [1, 1]} : vector<16x96xf32> to vector<16x8xf32>
    %95 = vector.shape_cast %94 : vector<16x8xf32> to vector<2x8x8xf32>
    %96 = arith.truncf %95 : vector<2x8x8xf32> to vector<2x8x8xbf16>
    %97 = vector.extract_strided_slice %38 {offsets = [0, 80], sizes = [16, 8], strides = [1, 1]} : vector<16x96xf32> to vector<16x8xf32>
    %98 = vector.shape_cast %97 : vector<16x8xf32> to vector<2x8x8xf32>
    %99 = arith.truncf %98 : vector<2x8x8xf32> to vector<2x8x8xbf16>
    "tpu.trace_start"() <{level = 10 : i32, message = "btd,bsd->bts"}> : () -> ()
    %cst_20 = arith.constant dense<0.000000e+00> : vector<2x8x8xf32>
    %100 = tpu.matmul %93, %96, %cst_20 {dimension_numbers = #tpu.dot_dimension_numbers<[2], [2], [1], [1], [0, 0, 0, 1, 1, 1], [0], [0]>} : vector<2x8x8xbf16>, vector<2x8x8xbf16>, vector<2x8x8xf32> -> vector<2x8x8xf32>
    "tpu.trace_stop"() : () -> ()
    %101 = arith.addf %100, %42 : vector<2x8x8xf32>
    %cst_21 = arith.constant dense<0xFF800000> : vector<2x8xf32>
    %102 = vector.multi_reduction <maximumf>, %101, %cst_21 [2] : vector<2x8x8xf32> to vector<2x8xf32>
    %103 = vector.shape_cast %102 : vector<2x8xf32> to vector<2x8x1xf32>
    %104 = vector.broadcast %103 : vector<2x8x1xf32> to vector<2x8x8xf32>
    %105 = arith.subf %101, %104 : vector<2x8x8xf32>
    %106 = math.exp %105 : vector<2x8x8xf32>
    %cst_22 = arith.constant dense<0.000000e+00> : vector<2x8xf32>
    %107 = vector.multi_reduction <add>, %106, %cst_22 [2] : vector<2x8x8xf32> to vector<2x8xf32>
    %108 = vector.shape_cast %107 : vector<2x8xf32> to vector<2x8x1xf32>
    %109 = tpu.reciprocal %108 {approx = true} : vector<2x8x1xf32> -> vector<2x8x1xf32>
    %110 = vector.broadcast %109 : vector<2x8x1xf32> to vector<2x8x8xf32>
    %111 = arith.mulf %106, %110 : vector<2x8x8xf32>
    %112 = arith.truncf %111 : vector<2x8x8xf32> to vector<2x8x8xbf16>
    "tpu.trace_start"() <{level = 10 : i32, message = "bts,bsd->btd"}> : () -> ()
    %cst_23 = arith.constant dense<0.000000e+00> : vector<2x8x8xf32>
    %113 = tpu.matmul %112, %99, %cst_23 {dimension_numbers = #tpu.dot_dimension_numbers<[2], [1], [1], [2], [0, 0, 0, 1, 1, 2], [0], [0]>} : vector<2x8x8xbf16>, vector<2x8x8xbf16>, vector<2x8x8xf32> -> vector<2x8x8xf32>
    "tpu.trace_stop"() : () -> ()
    %114 = vector.shape_cast %113 : vector<2x8x8xf32> to vector<16x8xf32>
    %115 = vector.extract_strided_slice %38 {offsets = [0, 24], sizes = [16, 8], strides = [1, 1]} : vector<16x96xf32> to vector<16x8xf32>
    %116 = vector.shape_cast %115 : vector<16x8xf32> to vector<2x8x8xf32>
    %117 = arith.truncf %116 : vector<2x8x8xf32> to vector<2x8x8xbf16>
    %118 = vector.extract_strided_slice %38 {offsets = [0, 56], sizes = [16, 8], strides = [1, 1]} : vector<16x96xf32> to vector<16x8xf32>
    %119 = vector.shape_cast %118 : vector<16x8xf32> to vector<2x8x8xf32>
    %120 = arith.truncf %119 : vector<2x8x8xf32> to vector<2x8x8xbf16>
    %121 = vector.extract_strided_slice %38 {offsets = [0, 88], sizes = [16, 8], strides = [1, 1]} : vector<16x96xf32> to vector<16x8xf32>
    %122 = vector.shape_cast %121 : vector<16x8xf32> to vector<2x8x8xf32>
    %123 = arith.truncf %122 : vector<2x8x8xf32> to vector<2x8x8xbf16>
    "tpu.trace_start"() <{level = 10 : i32, message = "btd,bsd->bts"}> : () -> ()
    %cst_24 = arith.constant dense<0.000000e+00> : vector<2x8x8xf32>
    %124 = tpu.matmul %117, %120, %cst_24 {dimension_numbers = #tpu.dot_dimension_numbers<[2], [2], [1], [1], [0, 0, 0, 1, 1, 1], [0], [0]>} : vector<2x8x8xbf16>, vector<2x8x8xbf16>, vector<2x8x8xf32> -> vector<2x8x8xf32>
    "tpu.trace_stop"() : () -> ()
    %125 = arith.addf %124, %42 : vector<2x8x8xf32>
    %cst_25 = arith.constant dense<0xFF800000> : vector<2x8xf32>
    %126 = vector.multi_reduction <maximumf>, %125, %cst_25 [2] : vector<2x8x8xf32> to vector<2x8xf32>
    %127 = vector.shape_cast %126 : vector<2x8xf32> to vector<2x8x1xf32>
    %128 = vector.broadcast %127 : vector<2x8x1xf32> to vector<2x8x8xf32>
    %129 = arith.subf %125, %128 : vector<2x8x8xf32>
    %130 = math.exp %129 : vector<2x8x8xf32>
    %cst_26 = arith.constant dense<0.000000e+00> : vector<2x8xf32>
    %131 = vector.multi_reduction <add>, %130, %cst_26 [2] : vector<2x8x8xf32> to vector<2x8xf32>
    %132 = vector.shape_cast %131 : vector<2x8xf32> to vector<2x8x1xf32>
    %133 = tpu.reciprocal %132 {approx = true} : vector<2x8x1xf32> -> vector<2x8x1xf32>
    %134 = vector.broadcast %133 : vector<2x8x1xf32> to vector<2x8x8xf32>
    %135 = arith.mulf %130, %134 : vector<2x8x8xf32>
    %136 = arith.truncf %135 : vector<2x8x8xf32> to vector<2x8x8xbf16>
    "tpu.trace_start"() <{level = 10 : i32, message = "bts,bsd->btd"}> : () -> ()
    %cst_27 = arith.constant dense<0.000000e+00> : vector<2x8x8xf32>
    %137 = tpu.matmul %136, %123, %cst_27 {dimension_numbers = #tpu.dot_dimension_numbers<[2], [1], [1], [2], [0, 0, 0, 1, 1, 2], [0], [0]>} : vector<2x8x8xbf16>, vector<2x8x8xbf16>, vector<2x8x8xf32> -> vector<2x8x8xf32>
    "tpu.trace_stop"() : () -> ()
    %138 = vector.shape_cast %137 : vector<2x8x8xf32> to vector<16x8xf32>
    %139 = tpu.concatenate %66, %90, %114, %138 in 1 : vector<16x8xf32>, vector<16x8xf32>, vector<16x8xf32>, vector<16x8xf32> -> vector<16x32xf32>
    %140 = arith.truncf %139 : vector<16x32xf32> to vector<16x32xbf16>
    %c0_28 = arith.constant 0 : index
    %c0_29 = arith.constant 0 : index
    %141 = vector.load %arg4[%c0_28, %c0_29] : memref<32x32xbf16, #tpu.memory_space<vmem>>, vector<32x32xbf16>
    %cst_30 = arith.constant dense<0.000000e+00> : vector<16x32xf32>
    %142 = tpu.matmul %140, %141, %cst_30 {dimension_numbers = #tpu.dot_dimension_numbers<[1], [0], [0], [1], [0, 0, 1, 1], [], []>} : vector<16x32xbf16>, vector<32x32xbf16>, vector<16x32xf32> -> vector<16x32xf32>
    %143 = vector.broadcast %5 : vector<1x32xf32> to vector<16x32xf32>
    %144 = arith.addf %142, %143 : vector<16x32xf32>
    %145 = arith.addf %0, %144 : vector<16x32xf32>
    %cst_31 = arith.constant dense<0.000000e+00> : vector<16xf32>
    %146 = vector.multi_reduction <add>, %145, %cst_31 [1] : vector<16x32xf32> to vector<16xf32>
    %147 = vector.shape_cast %146 : vector<16xf32> to vector<16x1xf32>
    %cst_32 = arith.constant 3.200000e+01 : f32
    %148 = vector.broadcast %cst_32 : f32 to vector<16x1xf32>
    %149 = arith.divf %147, %148 : vector<16x1xf32>
    %150 = vector.broadcast %149 : vector<16x1xf32> to vector<16x32xf32>
    %151 = arith.subf %145, %150 : vector<16x32xf32>
    %152 = vector.broadcast %149 : vector<16x1xf32> to vector<16x32xf32>
    %153 = arith.subf %145, %152 : vector<16x32xf32>
    %154 = arith.mulf %151, %153 : vector<16x32xf32>
    %cst_33 = arith.constant dense<0.000000e+00> : vector<16xf32>
    %155 = vector.multi_reduction <add>, %154, %cst_33 [1] : vector<16x32xf32> to vector<16xf32>
    %156 = vector.shape_cast %155 : vector<16xf32> to vector<16x1xf32>
    %cst_34 = arith.constant 3.200000e+01 : f32
    %157 = vector.broadcast %cst_34 : f32 to vector<16x1xf32>
    %158 = arith.divf %156, %157 : vector<16x1xf32>
    %159 = vector.broadcast %149 : vector<16x1xf32> to vector<16x32xf32>
    %160 = arith.subf %145, %159 : vector<16x32xf32>
    %cst_35 = arith.constant 9.99999974E-6 : f32
    %161 = vector.broadcast %cst_35 : f32 to vector<16x1xf32>
    %162 = arith.addf %158, %161 : vector<16x1xf32>
    %163 = math.rsqrt %162 : vector<16x1xf32>
    %164 = vector.broadcast %163 : vector<16x1xf32> to vector<16x32xf32>
    %165 = arith.mulf %160, %164 : vector<16x32xf32>
    %166 = vector.broadcast %6 : vector<1x32xf32> to vector<16x32xf32>
    %167 = arith.mulf %165, %166 : vector<16x32xf32>
    %168 = vector.broadcast %7 : vector<1x32xf32> to vector<16x32xf32>
    %169 = arith.addf %167, %168 : vector<16x32xf32>
    %170 = arith.truncf %169 : vector<16x32xf32> to vector<16x32xbf16>
    %c0_36 = arith.constant 0 : index
    %c0_37 = arith.constant 0 : index
    %171 = vector.load %arg5[%c0_36, %c0_37] : memref<32x128xbf16, #tpu.memory_space<vmem>>, vector<32x128xbf16>
    %cst_38 = arith.constant dense<0.000000e+00> : vector<16x128xf32>
    %172 = tpu.matmul %170, %171, %cst_38 {dimension_numbers = #tpu.dot_dimension_numbers<[1], [0], [0], [1], [0, 0, 1, 1], [], []>} : vector<16x32xbf16>, vector<32x128xbf16>, vector<16x128xf32> -> vector<16x128xf32>
    %173 = vector.broadcast %8 : vector<1x128xf32> to vector<16x128xf32>
    %174 = arith.addf %172, %173 : vector<16x128xf32>
    %cst_39 = arith.constant 5.000000e-01 : f32
    %175 = vector.broadcast %cst_39 : f32 to vector<16x128xf32>
    %176 = arith.mulf %175, %174 : vector<16x128xf32>
    %cst_40 = arith.constant 0.707106769 : f32
    %177 = vector.broadcast %cst_40 : f32 to vector<16x128xf32>
    %178 = arith.mulf %174, %177 : vector<16x128xf32>
    %179 = math.erf %178 : vector<16x128xf32>
    %cst_41 = arith.constant 1.000000e+00 : f32
    %180 = vector.broadcast %cst_41 : f32 to vector<16x128xf32>
    %181 = arith.addf %180, %179 : vector<16x128xf32>
    %182 = arith.mulf %176, %181 : vector<16x128xf32>
    %183 = arith.truncf %182 : vector<16x128xf32> to vector<16x128xbf16>
    %c0_42 = arith.constant 0 : index
    %c0_43 = arith.constant 0 : index
    %184 = vector.load %arg6[%c0_42, %c0_43] : memref<128x32xbf16, #tpu.memory_space<vmem>>, vector<128x32xbf16>
    %cst_44 = arith.constant dense<0.000000e+00> : vector<16x32xf32>
    %185 = tpu.matmul %183, %184, %cst_44 {dimension_numbers = #tpu.dot_dimension_numbers<[1], [0], [0], [1], [0, 0, 1, 1], [], []>} : vector<16x128xbf16>, vector<128x32xbf16>, vector<16x32xf32> -> vector<16x32xf32>
    %186 = vector.broadcast %9 : vector<1x32xf32> to vector<16x32xf32>
    %187 = arith.addf %185, %186 : vector<16x32xf32>
    %188 = arith.addf %145, %187 : vector<16x32xf32>
    %c0_45 = arith.constant 0 : index
    %c0_46 = arith.constant 0 : index
    %189 = vector.load %arg7[%c0_45, %c0_46] : memref<16x32xf32, #tpu.memory_space<vmem>>, vector<16x32xf32>
    tpu.vector_store %arg7[%c0_45, %c0_46], %188 {strides = array<i32>} : memref<16x32xf32, #tpu.memory_space<vmem>>, vector<16x32xf32>,
    return
  }
}

</mosaic_0001>

<llo_original>
// kernel: tpu_custom_call.1
$region0: #{tpu_custom_call.1}
  #allocation0 [shape = 'u32[]', space=smem, size = 0x4, offset = 0x4, fixed_abs, tag = 'smem constant byte address 0x4 - core index']
  #allocation1 [shape = 'u32[72,128]{1,0:T(1,128)}', space=vmem, size = 0x9000, scoped, tag = 'internal scratch']
  %s0 = inlined_call_operand.vmem [shape: f32[16,32], index: 0, kind: input, shape index: {}]
  %s1 = inlined_call_operand.vmem [shape: f32[8,8], index: 1, kind: input, shape index: {}]
  %s2 = inlined_call_operand.vmem [shape: f32[8,128], index: 2, kind: input, shape index: {}]
  %s3 = inlined_call_operand.vmem [shape: bf16[32,96], index: 3, kind: input, shape index: {}]
  %s4 = inlined_call_operand.vmem [shape: bf16[32,32], index: 4, kind: input, shape index: {}]
  %s5 = inlined_call_operand.vmem [shape: bf16[32,128], index: 5, kind: input, shape index: {}]
  %s6 = inlined_call_operand.vmem [shape: bf16[128,32], index: 6, kind: input, shape index: {}]
  %s7 = inlined_call_operand.hbm [shape: f32[16,32], index: 7, kind: output, shape index: {}]
  %s8 = sld [smem:[#allocation0]]
  $region38: #{tpu_custom_call.1} parent=0
    _
  %s10 = ssub.s32 1, %s8
  %s11 = scalar_select 0, %s10, %s8
  $region1: #{tpu_custom_call.1} parent=0
    #allocation2 [shape = 'u8[8192]{0}', space=vmem, size = 0x2000, scoped, tag = 'output window, operand 0, single buffered']
    #allocation3 [shape = 's32[1]{0}', space=sflag, size = 0x4, scoped, tag = 'scoped memory for tpu_custom_call.1']
    %12 = vsyncpa [#allocation3], 0
    // Predicated region
    $region2: #{tpu_custom_call.1} parent=1 // pred_check
      _
    $region3: #{tpu_custom_call.1} parent=1 // pred_check_branch
      %14 = sbr.rel (0) target = $region5
    $region4: #{tpu_custom_call.1} parent=1 // pred_region
      _
    $region5: #{tpu_custom_call.1} parent=1 // pred_fallthru
      _
    // Predicated region
    $region6: #{tpu_custom_call.1} parent=1 // pred_check
      _
    $region7: #{tpu_custom_call.1} parent=1 // pred_check_branch
      %16 = sbr.rel (0) target = $region9
    $region8: #{tpu_custom_call.1} parent=1 // pred_region
      _
    $region9: #{tpu_custom_call.1} parent=1 // pred_fallthru
      _
    // Predicated region
    $region10: #{tpu_custom_call.1} parent=1 // pred_check
      _
    $region11: #{tpu_custom_call.1} parent=1 // pred_check_branch
      %18 = sbr.rel (0) target = $region13
    $region12: #{tpu_custom_call.1} parent=1 // pred_region
      _
    $region13: #{tpu_custom_call.1} parent=1 // pred_fallthru
      _
    // Predicated region
    $region14: #{tpu_custom_call.1} parent=1 // pred_check
      _
    $region15: #{tpu_custom_call.1} parent=1 // pred_check_branch
      %20 = sbr.rel (0) target = $region17
    $region16: #{tpu_custom_call.1} parent=1 // pred_region
      _
    $region17: #{tpu_custom_call.1} parent=1 // pred_fallthru
      _
    // Predicated region
    $region18: #{tpu_custom_call.1} parent=1 // pred_check
      _
    $region19: #{tpu_custom_call.1} parent=1 // pred_check_branch
      %22 = sbr.rel (0) target = $region21
    $region20: #{tpu_custom_call.1} parent=1 // pred_region
      _
    $region21: #{tpu_custom_call.1} parent=1 // pred_fallthru
      _
    // Predicated region
    $region22: #{tpu_custom_call.1} parent=1 // pred_check
      _
    $region23: #{tpu_custom_call.1} parent=1 // pred_check_branch
      %24 = sbr.rel (0) target = $region25
    $region24: #{tpu_custom_call.1} parent=1 // pred_region
      _
    $region25: #{tpu_custom_call.1} parent=1 // pred_fallthru
      _
    // Predicated region
    $region26: #{tpu_custom_call.1} parent=1 // pred_check
      _
    $region27: #{tpu_custom_call.1} parent=1 // pred_check_branch
      %26 = sbr.rel (0) target = $region29
    $region28: #{tpu_custom_call.1} parent=1 // pred_region
      _
    $region29: #{tpu_custom_call.1} parent=1 // pred_fallthru
      _
    %v28 = vld [vmem:[%s0] sm:$0xff]
    %v29 = vld [vmem:[%s0 + $0x8] sm:$0xff]
    %v30 = vld [vmem:[%s2] sm:$0xff]
    %vm31 = vcmask 261120
    %v32 = vsel %vm31, %v28, 0.0
    %33 = vadd.xlane.f32.xlu0 %v32
    %v34 = vpop.xlane.xlu0 %33
    %v35 = vsel %vm31, %v29, 0.0
    %36 = vadd.xlane.f32.xlu0 %v35
    %v37 = vpop.xlane.xlu0 %36
    %v38 = vrcp.pop 32.0
    %v39 = vmul.f32 32.0, %v38
    %v40 = vsub.f32 1.0, %v39
    %v41 = vmul.f32 %v38, %v40
    %v42 = vadd.f32 %v38, %v41
    %vm43 = vweird.f32 %v38
    %v44 = vsel %vm43, %v38, %v42
    %v45 = vmul.f32 %v34, %v44
    %v46 = vmul.f32 %v37, %v44
    %v47 = vsub.f32 %v28, %v45
    %v48 = vsub.f32 %v29, %v46
    %v49 = vmul.f32 %v47, %v47
    %v50 = vmul.f32 %v48, %v48
    %v51 = vsel %vm31, %v49, 0.0
    %52 = vadd.xlane.f32.xlu0 %v51
    %v53 = vpop.xlane.xlu0 %52
    %v54 = vsel %vm31, %v50, 0.0
    %55 = vadd.xlane.f32.xlu0 %v54
    %v56 = vpop.xlane.xlu0 %55
    %v57 = vmul.f32 %v53, %v44
    %v58 = vmul.f32 %v56, %v44
    %v59 = vadd.f32 %v57, 1e-05
    %v60 = vadd.f32 %v58, 1e-05
    %v61 = vrsqrt.pop %v59
    %v62 = vmul.f32 %v61, %v59
    %v63 = vmul.f32 %v62, %v61
    %v64 = vmul.f32 0.5, %v63
    %v65 = vsub.f32 1.5, %v64
    %v66 = vmul.f32 %v61, %v65
    %vm67 = vweird.f32 %v59
    %vm68 = vweird.f32 %v61
    %vm69 = vmor %vm67, %vm68
    %v70 = vsel %vm69, %v61, %v66
    %v71 = vrsqrt.pop %v60
    %v72 = vmul.f32 %v71, %v60
    %v73 = vmul.f32 %v72, %v71
    %v74 = vmul.f32 0.5, %v73
    %v75 = vsub.f32 1.5, %v74
    %v76 = vmul.f32 %v71, %v75
    %vm77 = vweird.f32 %v60
    %vm78 = vweird.f32 %v71
    %vm79 = vmor %vm77, %vm78
    %v80 = vsel %vm79, %v71, %v76
    %v81 = vmul.f32 %v47, %v70
    %v82 = vmul.f32 %v48, %v80
    %v83 = vperm.slane %v30, 0
    %v84 = vmul.f32 %v81, %v83
    %v85 = vmul.f32 %v82, %v83
    %v86 = vperm.slane %v30, 1
    %v87 = vadd.f32 %v84, %v86
    %v88 = vadd.f32 %v85, %v86
    %v89 = vpack.c.bf16 %v88, %v87
    %v90 = vld [vmem:[%s3] sm:$0xf]
    %v91 = vld [vmem:[%s3 + $0x4] sm:$0xf]
    %v92 = vld [vmem:[%s3 + $0x8] sm:$0xf]
    %v93 = vld [vmem:[%s3 + $0xc] sm:$0xf]
    %v94 = vperm.slane %v30, 2
    %v99 = vunpack.c.l.b16 %v90
    %v100 = vunpack.c.l.b16 %v91
    %v101 = vunpack.c.l.b16 %v92
    %v102 = vunpack.c.l.b16 %v93
    %v103 = vpack.c.b16 %v100, %v99
    %v104 = vpack.c.b16 %v102, %v101
    %v108 = vsel %vm31, %v89, 0
    %110 = vmatpush.bf16.msra.mxu0 0
    %111 = vmatpush.bf16.msra.mxu0 0
    %112 = vmatpush.bf16.msra.mxu0 0
    %113 = vmatpush.bf16.msra.mxu0 0
    %114 = vmatpush.bf16.msra.mxu0 0
    %115 = vmatpush.bf16.msra.mxu0 0
    %116 = vmatpush.bf16.msra.mxu0 %v104
    %117 = vmatpush.bf16.msra.mxu0 %v103
    %118 = vmatmul.bf16.gmra.mxu0 %v108
    %v119 = vpop.f32.mrf.mxu0
    %v120 = vadd.f32 %v94, %v119
    %v121 = vpop.f32.mrf.mxu0
    %v122 = vadd.f32 %v94, %v121
    %123 = vdwg.mxu0
    %v124 = vld [vmem:[%s1] sm:$0xff]
    %v125 = vpack.c.bf16 %v120, %v120
    %v126 = vpack.c.bf16 %v122, %v122
    %v128 = vunpack.c.l.b16 %v125
    %v129 = vpack.c.b16 %v128, %v128
    %130 = vrot.lane.b32.xlu0 %v129, 96
    %v131 = vpop.permute.xlu0 %130
    %vm132 = vcmask 64512
    %v134 = vsel %vm132, %v125, 0
    %v137 = vsel %vm132, %v131, 0
    %139 = vmatpush.bf16.xpose.msra.mxu0 0
    %140 = vmatpush.bf16.xpose.msra.mxu0 0
    %141 = vmatpush.bf16.xpose.msra.mxu0 0
    %142 = vmatpush.bf16.xpose.msra.mxu0 0
    %143 = vmatpush.bf16.xpose.msra.mxu0 0
    %144 = vmatpush.bf16.xpose.msra.mxu0 0
    %145 = vmatpush.bf16.xpose.msra.mxu0 0
    %146 = vmatpush.bf16.xpose.msra.mxu0 %v137
    %147 = vmatmul.bf16.gmra.mxu0 %v134
    %v148 = vpop.f32.mrf.mxu0
    %v149 = vadd.f32 %v124, %v148
    %v150 = vpop.f32.mrf.mxu0
    %151 = vdwg.mxu0
    %v153 = vunpack.c.l.b16 %v126
    %v154 = vpack.c.b16 %v153, %v153
    %155 = vrot.lane.b32.xlu0 %v154, 96
    %v156 = vpop.permute.xlu0 %155
    %v158 = vsel %vm132, %v126, 0
    %v161 = vsel %vm132, %v156, 0
    %163 = vmatpush.bf16.xpose.msra.mxu0 0
    %164 = vmatpush.bf16.xpose.msra.mxu0 0
    %165 = vmatpush.bf16.xpose.msra.mxu0 0
    %166 = vmatpush.bf16.xpose.msra.mxu0 0
    %167 = vmatpush.bf16.xpose.msra.mxu0 0
    %168 = vmatpush.bf16.xpose.msra.mxu0 0
    %169 = vmatpush.bf16.xpose.msra.mxu0 0
    %170 = vmatpush.bf16.xpose.msra.mxu0 %v161
    %171 = vmatmul.bf16.gmra.mxu0 %v158
    %v172 = vpop.f32.mrf.mxu0
    %v173 = vadd.f32 %v124, %v172
    %v174 = vpop.f32.mrf.mxu0
    %175 = vdwg.mxu0
    %v176 = vsel %vm132, %v149, -inf
    %177 = vmax.xlane.f32.xlu0 %v176
    %v178 = vpop.xlane.xlu0 %177
    %v179 = vsel %vm132, %v173, -inf
    %180 = vmax.xlane.f32.xlu0 %v179
    %v181 = vpop.xlane.xlu0 %180
    %v182 = vsub.f32 %v149, %v178
    %v183 = vsub.f32 %v173, %v181
    %v184 = vmul.f32 %v182, 1.442695
    %v185 = vpow.pop %v184
    %v186 = vmul.f32 %v183, 1.442695
    %v187 = vpow.pop %v186
    %v188 = vsel %vm132, %v185, 0.0
    %189 = vadd.xlane.f32.xlu0 %v188
    %v190 = vpop.xlane.xlu0 %189
    %v191 = vsel %vm132, %v187, 0.0
    %192 = vadd.xlane.f32.xlu0 %v191
    %v193 = vpop.xlane.xlu0 %192
    %v194 = vrcp.pop %v190
    %v195 = vrcp.pop %v193
    %v196 = vmul.f32 %v185, %v194
    %v197 = vmul.f32 %v187, %v195
    %v198 = vpack.c.bf16 %v196, %v196
    %v199 = vpack.c.bf16 %v197, %v197
    %200 = vrot.lane.b32.xlu0 %v129, 64
    %v201 = vpop.permute.xlu0 %200
    %v203 = vsel %vm132, %v198, 0
    %vm205 = vcmask 1043456
    %v207 = vsel %vm205, %v201, 0
    %209 = vmatpush.bf16.msra.mxu0 0
    %210 = vmatpush.bf16.msra.mxu0 0
    %211 = vmatpush.bf16.msra.mxu0 0
    %212 = vmatpush.bf16.msra.mxu0 0
    %213 = vmatpush.bf16.msra.mxu0 0
    %214 = vmatpush.bf16.msra.mxu0 0
    %215 = vmatpush.bf16.msra.mxu0 0
    %216 = vmatpush.bf16.msra.mxu0 %v207
    %217 = vmatmul.bf16.gmra.mxu0 %v203
    %v218 = vpop.f32.mrf.mxu0
    %v219 = vadd.f32 0.0, %v218
    %v220 = vpop.f32.mrf.mxu0
    %221 = vdwg.mxu0
    %222 = vrot.lane.b32.xlu0 %v154, 64
    %v223 = vpop.permute.xlu0 %222
    %v225 = vsel %vm132, %v199, 0
    %v228 = vsel %vm205, %v223, 0
    %230 = vmatpush.bf16.msra.mxu0 0
    %231 = vmatpush.bf16.msra.mxu0 0
    %232 = vmatpush.bf16.msra.mxu0 0
    %233 = vmatpush.bf16.msra.mxu0 0
    %234 = vmatpush.bf16.msra.mxu0 0
    %235 = vmatpush.bf16.msra.mxu0 0
    %236 = vmatpush.bf16.msra.mxu0 0
    %237 = vmatpush.bf16.msra.mxu0 %v228
    %238 = vmatmul.bf16.gmra.mxu0 %v225
    %v239 = vpop.f32.mrf.mxu0
    %v240 = vadd.f32 0.0, %v239
    %v241 = vpop.f32.mrf.mxu0
    %242 = vdwg.mxu0
    %243 = vrot.lane.b32.xlu0 %v129, 120
    %v244 = vpop.permute.xlu0 %243
    %245 = vrot.lane.b32.xlu0 %v129, 88
    %v246 = vpop.permute.xlu0 %245
    %v248 = vsel %vm132, %v244, 0
    %v251 = vsel %vm132, %v246, 0
    %253 = vmatpush.bf16.xpose.msra.mxu0 0
    %254 = vmatpush.bf16.xpose.msra.mxu0 0
    %255 = vmatpush.bf16.xpose.msra.mxu0 0
    %256 = vmatpush.bf16.xpose.msra.mxu0 0
    %257 = vmatpush.bf16.xpose.msra.mxu0 0
    %258 = vmatpush.bf16.xpose.msra.mxu0 0
    %259 = vmatpush.bf16.xpose.msra.mxu0 0
    %260 = vmatpush.bf16.xpose.msra.mxu0 %v251
    %261 = vmatmul.bf16.gmra.mxu0 %v248
    %v262 = vpop.f32.mrf.mxu0
    %v263 = vadd.f32 %v124, %v262
    %v264 = vpop.f32.mrf.mxu0
    %265 = vdwg.mxu0
    %266 = vrot.lane.b32.xlu0 %v154, 120
    %v267 = vpop.permute.xlu0 %266
    %268 = vrot.lane.b32.xlu0 %v154, 88
    %v269 = vpop.permute.xlu0 %268
    %v271 = vsel %vm132, %v267, 0
    %v274 = vsel %vm132, %v269, 0
    %276 = vmatpush.bf16.xpose.msra.mxu0 0
    %277 = vmatpush.bf16.xpose.msra.mxu0 0
    %278 = vmatpush.bf16.xpose.msra.mxu0 0
    %279 = vmatpush.bf16.xpose.msra.mxu0 0
    %280 = vmatpush.bf16.xpose.msra.mxu0 0
    %281 = vmatpush.bf16.xpose.msra.mxu0 0
    %282 = vmatpush.bf16.xpose.msra.mxu0 0
    %283 = vmatpush.bf16.xpose.msra.mxu0 %v274
    %284 = vmatmul.bf16.gmra.mxu0 %v271
    %v285 = vpop.f32.mrf.mxu0
    %v286 = vadd.f32 %v124, %v285
    %v287 = vpop.f32.mrf.mxu0
    %288 = vdwg.mxu0
    %v289 = vsel %vm132, %v263, -inf
    %290 = vmax.xlane.f32.xlu0 %v289
    %v291 = vpop.xlane.xlu0 %290
    %v292 = vsel %vm132, %v286, -inf
    %293 = vmax.xlane.f32.xlu0 %v292
    %v294 = vpop.xlane.xlu0 %293
    %v295 = vsub.f32 %v263, %v291
    %v296 = vsub.f32 %v286, %v294
    %v297 = vmul.f32 %v295, 1.442695
    %v298 = vpow.pop %v297
    %v299 = vmul.f32 %v296, 1.442695
    %v300 = vpow.pop %v299
    %v301 = vsel %vm132, %v298, 0.0
    %302 = vadd.xlane.f32.xlu0 %v301
    %v303 = vpop.xlane.xlu0 %302
    %v304 = vsel %vm132, %v300, 0.0
    %305 = vadd.xlane.f32.xlu0 %v304
    %v306 = vpop.xlane.xlu0 %305
    %v307 = vrcp.pop %v303
    %v308 = vrcp.pop %v306
    %v309 = vmul.f32 %v298, %v307
    %v310 = vmul.f32 %v300, %v308
    %v311 = vpack.c.bf16 %v309, %v309
    %v312 = vpack.c.bf16 %v310, %v310
    %313 = vrot.lane.b32.xlu0 %v129, 56
    %v314 = vpop.permute.xlu0 %313
    %v316 = vsel %vm132, %v311, 0
    %v319 = vsel %vm205, %v314, 0
    %321 = vmatpush.bf16.msra.mxu0 0
    %322 = vmatpush.bf16.msra.mxu0 0
    %323 = vmatpush.bf16.msra.mxu0 0
    %324 = vmatpush.bf16.msra.mxu0 0
    %325 = vmatpush.bf16.msra.mxu0 0
    %326 = vmatpush.bf16.msra.mxu0 0
    %327 = vmatpush.bf16.msra.mxu0 0
    %328 = vmatpush.bf16.msra.mxu0 %v319
    %329 = vmatmul.bf16.gmra.mxu0 %v316
    %v330 = vpop.f32.mrf.mxu0
    %v331 = vadd.f32 0.0, %v330
    %v332 = vpop.f32.mrf.mxu0
    %333 = vdwg.mxu0
    %334 = vrot.lane.b32.xlu0 %v154, 56
    %v335 = vpop.permute.xlu0 %334
    %v337 = vsel %vm132, %v312, 0
    %v340 = vsel %vm205, %v335, 0
    %342 = vmatpush.bf16.msra.mxu0 0
    %343 = vmatpush.bf16.msra.mxu0 0
    %344 = vmatpush.bf16.msra.mxu0 0
    %345 = vmatpush.bf16.msra.mxu0 0
    %346 = vmatpush.bf16.msra.mxu0 0
    %347 = vmatpush.bf16.msra.mxu0 0
    %348 = vmatpush.bf16.msra.mxu0 0
    %349 = vmatpush.bf16.msra.mxu0 %v340
    %350 = vmatmul.bf16.gmra.mxu0 %v337
    %v351 = vpop.f32.mrf.mxu0
    %v352 = vadd.f32 0.0, %v351
    %v353 = vpop.f32.mrf.mxu0
    %354 = vdwg.mxu0
    %355 = vrot.lane.b32.xlu0 %v129, 112
    %v356 = vpop.permute.xlu0 %355
    %357 = vrot.lane.b32.xlu0 %v129, 80
    %v358 = vpop.permute.xlu0 %357
    %v360 = vsel %vm132, %v356, 0
    %v363 = vsel %vm132, %v358, 0
    %365 = vmatpush.bf16.xpose.msra.mxu0 0
    %366 = vmatpush.bf16.xpose.msra.mxu0 0
    %367 = vmatpush.bf16.xpose.msra.mxu0 0
    %368 = vmatpush.bf16.xpose.msra.mxu0 0
    %369 = vmatpush.bf16.xpose.msra.mxu0 0
    %370 = vmatpush.bf16.xpose.msra.mxu0 0
    %371 = vmatpush.bf16.xpose.msra.mxu0 0
    %372 = vmatpush.bf16.xpose.msra.mxu0 %v363
    %373 = vmatmul.bf16.gmra.mxu0 %v360
    %v374 = vpop.f32.mrf.mxu0
    %v375 = vadd.f32 %v124, %v374
    %v376 = vpop.f32.mrf.mxu0
    %377 = vdwg.mxu0
    %378 = vrot.lane.b32.xlu0 %v154, 112
    %v379 = vpop.permute.xlu0 %378
    %380 = vrot.lane.b32.xlu0 %v154, 80
    %v381 = vpop.permute.xlu0 %380
    %v383 = vsel %vm132, %v379, 0
    %v386 = vsel %vm132, %v381, 0
    %388 = vmatpush.bf16.xpose.msra.mxu0 0
    %389 = vmatpush.bf16.xpose.msra.mxu0 0
    %390 = vmatpush.bf16.xpose.msra.mxu0 0
    %391 = vmatpush.bf16.xpose.msra.mxu0 0
    %392 = vmatpush.bf16.xpose.msra.mxu0 0
    %393 = vmatpush.bf16.xpose.msra.mxu0 0
    %394 = vmatpush.bf16.xpose.msra.mxu0 0
    %395 = vmatpush.bf16.xpose.msra.mxu0 %v386
    %396 = vmatmul.bf16.gmra.mxu0 %v383
    %v397 = vpop.f32.mrf.mxu0
    %v398 = vadd.f32 %v124, %v397
    %v399 = vpop.f32.mrf.mxu0
    %400 = vdwg.mxu0
    %v401 = vsel %vm132, %v375, -inf
    %402 = vmax.xlane.f32.xlu0 %v401
    %v403 = vpop.xlane.xlu0 %402
    %v404 = vsel %vm132, %v398, -inf
    %405 = vmax.xlane.f32.xlu0 %v404
    %v406 = vpop.xlane.xlu0 %405
    %v407 = vsub.f32 %v375, %v403
    %v408 = vsub.f32 %v398, %v406
    %v409 = vmul.f32 %v407, 1.442695
    %v410 = vpow.pop %v409
    %v411 = vmul.f32 %v408, 1.442695
    %v412 = vpow.pop %v411
    %v413 = vsel %vm132, %v410, 0.0
    %414 = vadd.xlane.f32.xlu0 %v413
    %v415 = vpop.xlane.xlu0 %414
    %v416 = vsel %vm132, %v412, 0.0
    %417 = vadd.xlane.f32.xlu0 %v416
    %v418 = vpop.xlane.xlu0 %417
    %v419 = vrcp.pop %v415
    %v420 = vrcp.pop %v418
    %v421 = vmul.f32 %v410, %v419
    %v422 = vmul.f32 %v412, %v420
    %v423 = vpack.c.bf16 %v421, %v421
    %v424 = vpack.c.bf16 %v422, %v422
    %425 = vrot.lane.b32.xlu0 %v129, 48
    %v426 = vpop.permute.xlu0 %425
    %v428 = vsel %vm132, %v423, 0
    %v431 = vsel %vm205, %v426, 0
    %433 = vmatpush.bf16.msra.mxu0 0
    %434 = vmatpush.bf16.msra.mxu0 0
    %435 = vmatpush.bf16.msra.mxu0 0
    %436 = vmatpush.bf16.msra.mxu0 0
    %437 = vmatpush.bf16.msra.mxu0 0
    %438 = vmatpush.bf16.msra.mxu0 0
    %439 = vmatpush.bf16.msra.mxu0 0
    %440 = vmatpush.bf16.msra.mxu0 %v431
    %441 = vmatmul.bf16.gmra.mxu0 %v428
    %v442 = vpop.f32.mrf.mxu0
    %v443 = vadd.f32 0.0, %v442
    %v444 = vpop.f32.mrf.mxu0
    %445 = vdwg.mxu0
    %446 = vrot.lane.b32.xlu0 %v154, 48
    %v447 = vpop.permute.xlu0 %446
    %v449 = vsel %vm132, %v424, 0
    %v452 = vsel %vm205, %v447, 0
    %454 = vmatpush.bf16.msra.mxu0 0
    %455 = vmatpush.bf16.msra.mxu0 0
    %456 = vmatpush.bf16.msra.mxu0 0
    %457 = vmatpush.bf16.msra.mxu0 0
    %458 = vmatpush.bf16.msra.mxu0 0
    %459 = vmatpush.bf16.msra.mxu0 0
    %460 = vmatpush.bf16.msra.mxu0 0
    %461 = vmatpush.bf16.msra.mxu0 %v452
    %462 = vmatmul.bf16.gmra.mxu0 %v449
    %v463 = vpop.f32.mrf.mxu0
    %v464 = vadd.f32 0.0, %v463
    %v465 = vpop.f32.mrf.mxu0
    %466 = vdwg.mxu0
    %467 = vrot.lane.b32.xlu0 %v129, 104
    %v468 = vpop.permute.xlu0 %467
    %469 = vrot.lane.b32.xlu0 %v129, 72
    %v470 = vpop.permute.xlu0 %469
    %v472 = vsel %vm132, %v468, 0
    %v475 = vsel %vm132, %v470, 0
    %477 = vmatpush.bf16.xpose.msra.mxu0 0
    %478 = vmatpush.bf16.xpose.msra.mxu0 0
    %479 = vmatpush.bf16.xpose.msra.mxu0 0
    %480 = vmatpush.bf16.xpose.msra.mxu0 0
    %481 = vmatpush.bf16.xpose.msra.mxu0 0
    %482 = vmatpush.bf16.xpose.msra.mxu0 0
    %483 = vmatpush.bf16.xpose.msra.mxu0 0
    %484 = vmatpush.bf16.xpose.msra.mxu0 %v475
    %485 = vmatmul.bf16.gmra.mxu0 %v472
    %v486 = vpop.f32.mrf.mxu0
    %v487 = vadd.f32 %v124, %v486
    %v488 = vpop.f32.mrf.mxu0
    %489 = vdwg.mxu0
    %490 = vrot.lane.b32.xlu0 %v154, 104
    %v491 = vpop.permute.xlu0 %490
    %492 = vrot.lane.b32.xlu0 %v154, 72
    %v493 = vpop.permute.xlu0 %492
    %v495 = vsel %vm132, %v491, 0
    %v498 = vsel %vm132, %v493, 0
    %500 = vmatpush.bf16.xpose.msra.mxu0 0
    %501 = vmatpush.bf16.xpose.msra.mxu0 0
    %502 = vmatpush.bf16.xpose.msra.mxu0 0
    %503 = vmatpush.bf16.xpose.msra.mxu0 0
    %504 = vmatpush.bf16.xpose.msra.mxu0 0
    %505 = vmatpush.bf16.xpose.msra.mxu0 0
    %506 = vmatpush.bf16.xpose.msra.mxu0 0
    %507 = vmatpush.bf16.xpose.msra.mxu0 %v498
    %508 = vmatmul.bf16.gmra.mxu0 %v495
    %v509 = vpop.f32.mrf.mxu0
    %v510 = vadd.f32 %v124, %v509
    %v511 = vpop.f32.mrf.mxu0
    %512 = vdwg.mxu0
    %v513 = vsel %vm132, %v487, -inf
    %514 = vmax.xlane.f32.xlu0 %v513
    %v515 = vpop.xlane.xlu0 %514
    %v516 = vsel %vm132, %v510, -inf
    %517 = vmax.xlane.f32.xlu0 %v516
    %v518 = vpop.xlane.xlu0 %517
    %v519 = vsub.f32 %v487, %v515
    %v520 = vsub.f32 %v510, %v518
    %v521 = vmul.f32 %v519, 1.442695
    %v522 = vpow.pop %v521
    %v523 = vmul.f32 %v520, 1.442695
    %v524 = vpow.pop %v523
    %v525 = vsel %vm132, %v522, 0.0
    %526 = vadd.xlane.f32.xlu0 %v525
    %v527 = vpop.xlane.xlu0 %526
    %v528 = vsel %vm132, %v524, 0.0
    %529 = vadd.xlane.f32.xlu0 %v528
    %v530 = vpop.xlane.xlu0 %529
    %v531 = vrcp.pop %v527
    %v532 = vrcp.pop %v530
    %v533 = vmul.f32 %v522, %v531
    %v534 = vmul.f32 %v524, %v532
    %v535 = vpack.c.bf16 %v533, %v533
    %v536 = vpack.c.bf16 %v534, %v534
    %537 = vrot.lane.b32.xlu0 %v129, 40
    %v538 = vpop.permute.xlu0 %537
    %v540 = vsel %vm132, %v535, 0
    %v543 = vsel %vm205, %v538, 0
    %545 = vmatpush.bf16.msra.mxu0 0
    %546 = vmatpush.bf16.msra.mxu0 0
    %547 = vmatpush.bf16.msra.mxu0 0
    %548 = vmatpush.bf16.msra.mxu0 0
    %549 = vmatpush.bf16.msra.mxu0 0
    %550 = vmatpush.bf16.msra.mxu0 0
    %551 = vmatpush.bf16.msra.mxu0 0
    %552 = vmatpush.bf16.msra.mxu0 %v543
    %553 = vmatmul.bf16.gmra.mxu0 %v540
    %v554 = vpop.f32.mrf.mxu0
    %v555 = vadd.f32 0.0, %v554
    %v556 = vpop.f32.mrf.mxu0
    %557 = vdwg.mxu0
    %558 = vrot.lane.b32.xlu0 %v154, 40
    %v559 = vpop.permute.xlu0 %558
    %v561 = vsel %vm132, %v536, 0
    %v564 = vsel %vm205, %v559, 0
    %566 = vmatpush.bf16.msra.mxu0 0
    %567 = vmatpush.bf16.msra.mxu0 0
    %568 = vmatpush.bf16.msra.mxu0 0
    %569 = vmatpush.bf16.msra.mxu0 0
    %570 = vmatpush.bf16.msra.mxu0 0
    %571 = vmatpush.bf16.msra.mxu0 0
    %572 = vmatpush.bf16.msra.mxu0 0
    %573 = vmatpush.bf16.msra.mxu0 %v564
    %574 = vmatmul.bf16.gmra.mxu0 %v561
    %v575 = vpop.f32.mrf.mxu0
    %v576 = vadd.f32 0.0, %v575
    %v577 = vpop.f32.mrf.mxu0
    %578 = vdwg.mxu0
    %581 = vrot.lane.b32.xlu0 %v331, 8
    %v582 = vpop.permute.xlu0 %581
    %583 = vrot.lane.b32.xlu0 %v352, 8
    %v584 = vpop.permute.xlu0 %583
    %589 = vrot.lane.b32.xlu0 %v443, 16
    %v590 = vpop.permute.xlu0 %589
    %591 = vrot.lane.b32.xlu0 %v464, 16
    %v592 = vpop.permute.xlu0 %591
    %597 = vrot.lane.b32.xlu0 %v555, 24
    %v598 = vpop.permute.xlu0 %597
    %599 = vrot.lane.b32.xlu0 %v576, 24
    %v600 = vpop.permute.xlu0 %599
    %v603 = vsel %vm132, %v219, %v582
    %v604 = vsel %vm132, %v240, %v584
    %vm605 = vcmask 130048
    %v606 = vsel %vm605, %v603, %v590
    %v607 = vsel %vm605, %v604, %v592
    %vm608 = vcmask 195584
    %v609 = vsel %vm608, %v606, %v598
    %v610 = vsel %vm608, %v607, %v600
    %v611 = vpack.c.bf16 %v610, %v609
    %v612 = vld [vmem:[%s4] sm:$0xf]
    %v613 = vld [vmem:[%s4 + $0x4] sm:$0xf]
    %v614 = vld [vmem:[%s4 + $0x8] sm:$0xf]
    %v615 = vld [vmem:[%s4 + $0xc] sm:$0xf]
    %v616 = vperm.slane %v30, 3
    %v621 = vunpack.c.l.b16 %v612
    %v622 = vunpack.c.l.b16 %v613
    %v623 = vunpack.c.l.b16 %v614
    %v624 = vunpack.c.l.b16 %v615
    %v625 = vpack.c.b16 %v622, %v621
    %v626 = vpack.c.b16 %v624, %v623
    %v630 = vsel %vm31, %v611, 0
    %632 = vmatpush.bf16.msra.mxu0 0
    %633 = vmatpush.bf16.msra.mxu0 0
    %634 = vmatpush.bf16.msra.mxu0 0
    %635 = vmatpush.bf16.msra.mxu0 0
    %636 = vmatpush.bf16.msra.mxu0 0
    %637 = vmatpush.bf16.msra.mxu0 0
    %638 = vmatpush.bf16.msra.mxu0 %v626
    %639 = vmatpush.bf16.msra.mxu0 %v625
    %640 = vmatmul.bf16.gmra.mxu0 %v630
    %v641 = vpop.f32.mrf.mxu0
    %v642 = vadd.f32 %v616, %v641
    %v643 = vpop.f32.mrf.mxu0
    %v644 = vadd.f32 %v616, %v643
    %645 = vdwg.mxu0
    %v646 = vadd.f32 %v28, %v642
    %v647 = vadd.f32 %v29, %v644
    %v648 = vsel %vm31, %v646, 0.0
    %649 = vadd.xlane.f32.xlu0 %v648
    %v650 = vpop.xlane.xlu0 %649
    %v651 = vsel %vm31, %v647, 0.0
    %652 = vadd.xlane.f32.xlu0 %v651
    %v653 = vpop.xlane.xlu0 %652
    %v654 = vmul.f32 %v650, %v44
    %v655 = vmul.f32 %v653, %v44
    %v656 = vsub.f32 %v646, %v654
    %v657 = vsub.f32 %v647, %v655
    %v658 = vmul.f32 %v656, %v656
    %v659 = vmul.f32 %v657, %v657
    %v660 = vsel %vm31, %v658, 0.0
    %661 = vadd.xlane.f32.xlu0 %v660
    %v662 = vpop.xlane.xlu0 %661
    %v663 = vsel %vm31, %v659, 0.0
    %664 = vadd.xlane.f32.xlu0 %v663
    %v665 = vpop.xlane.xlu0 %664
    %v666 = vmul.f32 %v662, %v44
    %v667 = vmul.f32 %v665, %v44
    %v668 = vadd.f32 %v666, 1e-05
    %v669 = vadd.f32 %v667, 1e-05
    %v670 = vrsqrt.pop %v668
    %v671 = vmul.f32 %v670, %v668
    %v672 = vmul.f32 %v671, %v670
    %v673 = vmul.f32 0.5, %v672
    %v674 = vsub.f32 1.5, %v673
    %v675 = vmul.f32 %v670, %v674
    %vm676 = vweird.f32 %v668
    %vm677 = vweird.f32 %v670
    %vm678 = vmor %vm676, %vm677
    %v679 = vsel %vm678, %v670, %v675
    %v680 = vrsqrt.pop %v669
    %v681 = vmul.f32 %v680, %v669
    %v682 = vmul.f32 %v681, %v680
    %v683 = vmul.f32 0.5, %v682
    %v684 = vsub.f32 1.5, %v683
    %v685 = vmul.f32 %v680, %v684
    %vm686 = vweird.f32 %v669
    %vm687 = vweird.f32 %v680
    %vm688 = vmor %vm686, %vm687
    %v689 = vsel %vm688, %v680, %v685
    %v690 = vmul.f32 %v656, %v679
    %v691 = vmul.f32 %v657, %v689
    %v692 = vperm.slane %v30, 4
    %v693 = vmul.f32 %v690, %v692
    %v694 = vmul.f32 %v691, %v692
    %v695 = vperm.slane %v30, 5
    %v696 = vadd.f32 %v693, %v695
    %v697 = vadd.f32 %v694, %v695
    %v698 = vpack.c.bf16 %v697, %v696
    %v699 = vld [vmem:[%s5] sm:$0xf]
    %v700 = vld [vmem:[%s5 + $0x4] sm:$0xf]
    %v701 = vld [vmem:[%s5 + $0x8] sm:$0xf]
    %v702 = vld [vmem:[%s5 + $0xc] sm:$0xf]
    %v703 = vperm.slane %v30, 6
    %v708 = vunpack.c.l.b16 %v699
    %v709 = vunpack.c.l.b16 %v700
    %v710 = vunpack.c.l.b16 %v701
    %v711 = vunpack.c.l.b16 %v702
    %v712 = vpack.c.b16 %v709, %v708
    %v713 = vpack.c.b16 %v711, %v710
    %v717 = vsel %vm31, %v698, 0
    %719 = vmatpush.bf16.msra.mxu0 0
    %720 = vmatpush.bf16.msra.mxu0 0
    %721 = vmatpush.bf16.msra.mxu0 0
    %722 = vmatpush.bf16.msra.mxu0 0
    %723 = vmatpush.bf16.msra.mxu0 0
    %724 = vmatpush.bf16.msra.mxu0 0
    %725 = vmatpush.bf16.msra.mxu0 %v713
    %726 = vmatpush.bf16.msra.mxu0 %v712
    %727 = vmatmul.bf16.gmra.mxu0 %v717
    %v728 = vpop.f32.mrf.mxu0
    %v729 = vadd.f32 %v703, %v728
    %v730 = vpop.f32.mrf.mxu0
    %v731 = vadd.f32 %v703, %v730
    %732 = vdwg.mxu0
    %v733 = vmul.f32 %v729, 0.5
    %v734 = vmul.f32 %v731, 0.5
    %v735 = vmul.f32 %v729, 0.70710677
    %v736 = vmul.f32 %v731, 0.70710677
    %v737 = vmul.f32 %v735, %v735
    %v738 = vmin.f32 16.0, %v737
    %v739 = vmul.f32 %v738, 2.1237322e-06
    %v740 = vadd.f32 %v739, 0.00028619796
    %v741 = vmul.f32 %v738, %v740
    %v742 = vadd.f32 %v741, 0.0036580483
    %v743 = vmul.f32 %v738, %v742
    %v744 = vadd.f32 %v743, 0.05243302
    %v745 = vmul.f32 %v738, %v744
    %v746 = vadd.f32 %v745, 0.18741608
    %v747 = vmul.f32 %v738, %v746
    %v748 = vadd.f32 %v747, 1.1283791
    %v749 = vmul.f32 %v735, %v748
    %v750 = vmul.f32 %v738, 3.8918573e-05
    %v751 = vadd.f32 %v750, 0.001143296
    %v752 = vmul.f32 %v738, %v751
    %v753 = vadd.f32 %v752, 0.014752088
    %v754 = vmul.f32 %v738, %v753
    %v755 = vadd.f32 %v754, 0.112945676
    %v756 = vmul.f32 %v738, %v755
    %v757 = vadd.f32 %v756, 0.4994258
    %v758 = vmul.f32 %v738, %v757
    %v759 = vadd.f32 %v758, 1.0
    %v760 = vrcp.pop %v759
    %v761 = vmul.f32 %v759, %v760
    %v762 = vsub.f32 1.0, %v761
    %v763 = vmul.f32 %v760, %v762
    %v764 = vadd.f32 %v760, %v763
    %vm765 = vweird.f32 %v759
    %vm766 = vweird.f32 %v760
    %vm767 = vmor %vm765, %vm766
    %v768 = vsel %vm767, %v760, %v764
    %v769 = vand.u32 2147483647, %v759
    %vm770 = vcmp.eq.f32.partialorder %v769, 8.507059e+37
    %v771 = vand.u32 %v759, 2147483648
    %v772 = vor.u32 1.1754944e-38, %v771
    %v773 = vsel %vm770, %v772, %v768
    %v774 = vmul.f32 %v749, %v773
    %v775 = vmin.f32 %v774, 1.0
    %v776 = vmax.f32 %v775, -1.0
    %v777 = vmul.f32 %v736, %v736
    %v778 = vmin.f32 16.0, %v777
    %v779 = vmul.f32 %v778, 2.1237322e-06
    %v780 = vadd.f32 %v779, 0.00028619796
    %v781 = vmul.f32 %v778, %v780
    %v782 = vadd.f32 %v781, 0.0036580483
    %v783 = vmul.f32 %v778, %v782
    %v784 = vadd.f32 %v783, 0.05243302
    %v785 = vmul.f32 %v778, %v784
    %v786 = vadd.f32 %v785, 0.18741608
    %v787 = vmul.f32 %v778, %v786
    %v788 = vadd.f32 %v787, 1.1283791
    %v789 = vmul.f32 %v736, %v788
    %v790 = vmul.f32 %v778, 3.8918573e-05
    %v791 = vadd.f32 %v790, 0.001143296
    %v792 = vmul.f32 %v778, %v791
    %v793 = vadd.f32 %v792, 0.014752088
    %v794 = vmul.f32 %v778, %v793
    %v795 = vadd.f32 %v794, 0.112945676
    %v796 = vmul.f32 %v778, %v795
    %v797 = vadd.f32 %v796, 0.4994258
    %v798 = vmul.f32 %v778, %v797
    %v799 = vadd.f32 %v798, 1.0
    %v800 = vrcp.pop %v799
    %v801 = vmul.f32 %v799, %v800
    %v802 = vsub.f32 1.0, %v801
    %v803 = vmul.f32 %v800, %v802
    %v804 = vadd.f32 %v800, %v803
    %vm805 = vweird.f32 %v799
    %vm806 = vweird.f32 %v800
    %vm807 = vmor %vm805, %vm806
    %v808 = vsel %vm807, %v800, %v804
    %v809 = vand.u32 2147483647, %v799
    %vm810 = vcmp.eq.f32.partialorder %v809, 8.507059e+37
    %v811 = vand.u32 %v799, 2147483648
    %v812 = vor.u32 1.1754944e-38, %v811
    %v813 = vsel %vm810, %v812, %v808
    %v814 = vmul.f32 %v789, %v813
    %v815 = vmin.f32 %v814, 1.0
    %v816 = vmax.f32 %v815, -1.0
    %v817 = vadd.f32 %v776, 1.0
    %v818 = vadd.f32 %v816, 1.0
    %v819 = vmul.f32 %v733, %v817
    %v820 = vmul.f32 %v734, %v818
    %v821 = vpack.c.bf16 %v820, %v819
    %v822 = vld [vmem:[%s6] sm:$0xf]
    %v823 = vld [vmem:[%s6 + $0x4] sm:$0xf]
    %v824 = vld [vmem:[%s6 + $0x8] sm:$0xf]
    %v825 = vld [vmem:[%s6 + $0xc] sm:$0xf]
    %v826 = vld [vmem:[%s6 + $0x10] sm:$0xf]
    %v827 = vld [vmem:[%s6 + $0x14] sm:$0xf]
    %v828 = vld [vmem:[%s6 + $0x18] sm:$0xf]
    %v829 = vld [vmem:[%s6 + $0x1c] sm:$0xf]
    %v830 = vld [vmem:[%s6 + $0x20] sm:$0xf]
    %v831 = vld [vmem:[%s6 + $0x24] sm:$0xf]
    %v832 = vld [vmem:[%s6 + $0x28] sm:$0xf]
    %v833 = vld [vmem:[%s6 + $0x2c] sm:$0xf]
    %v834 = vld [vmem:[%s6 + $0x30] sm:$0xf]
    %v835 = vld [vmem:[%s6 + $0x34] sm:$0xf]
    %v836 = vld [vmem:[%s6 + $0x38] sm:$0xf]
    %v837 = vld [vmem:[%s6 + $0x3c] sm:$0xf]
    %v838 = vperm.slane %v30, 7
    %v855 = vunpack.c.l.b16 %v822
    %v856 = vunpack.c.l.b16 %v823
    %v857 = vunpack.c.l.b16 %v824
    %v858 = vunpack.c.l.b16 %v825
    %v859 = vunpack.c.l.b16 %v826
    %v860 = vunpack.c.l.b16 %v827
    %v861 = vunpack.c.l.b16 %v828
    %v862 = vunpack.c.l.b16 %v829
    %v863 = vunpack.c.l.b16 %v830
    %v864 = vunpack.c.l.b16 %v831
    %v865 = vunpack.c.l.b16 %v832
    %v866 = vunpack.c.l.b16 %v833
    %v867 = vunpack.c.l.b16 %v834
    %v868 = vunpack.c.l.b16 %v835
    %v869 = vunpack.c.l.b16 %v836
    %v870 = vunpack.c.l.b16 %v837
    %v871 = vpack.c.b16 %v856, %v855
    %v872 = vpack.c.b16 %v858, %v857
    %v873 = vpack.c.b16 %v860, %v859
    %v874 = vpack.c.b16 %v862, %v861
    %v875 = vpack.c.b16 %v864, %v863
    %v876 = vpack.c.b16 %v866, %v865
    %v877 = vpack.c.b16 %v868, %v867
    %v878 = vpack.c.b16 %v870, %v869
    %887 = vmatpush.bf16.msra.mxu0 %v878
    %888 = vmatpush.bf16.msra.mxu0 %v877
    %889 = vmatpush.bf16.msra.mxu0 %v876
    %890 = vmatpush.bf16.msra.mxu0 %v875
    %891 = vmatpush.bf16.msra.mxu0 %v874
    %892 = vmatpush.bf16.msra.mxu0 %v873
    %893 = vmatpush.bf16.msra.mxu0 %v872
    %894 = vmatpush.bf16.msra.mxu0 %v871
    %895 = vmatmul.bf16.gmra.mxu0 %v821
    %v896 = vpop.f32.mrf.mxu0
    %v897 = vadd.f32 %v838, %v896
    %v898 = vpop.f32.mrf.mxu0
    %v899 = vadd.f32 %v838, %v898
    %900 = vdwg.mxu0
    %v901 = vadd.f32 %v646, %v897
    %v902 = vadd.f32 %v647, %v899
    %903 = vst.msk [vmem:[#allocation2] sm:$0xff] %vm31, %v901
    %904 = vst.msk [vmem:[#allocation2 + $0x8] sm:$0xff] %vm31, %v902
    // Predicated region
    $region30: #{tpu_custom_call.1} parent=1 // pred_check
      _
    $region31: #{tpu_custom_call.1} parent=1 // pred_check_branch
      %906 = sbr.rel (0) target = $region33
    $region32: #{tpu_custom_call.1} parent=1 // pred_region
      %908 = vsyncadd [#allocation3], 0
      %s909 = sshll.u32 [#allocation2], 4
      %s910 = int_to_ptr.vmem [resolvable:$true] %s909
      %s911 = sshll.u32 %s7, 4
      %s912 = int_to_ptr.hbm [resolvable:$true] %s911
      %917 = dma.vmem_to_hbm [thread:$0]  %s910, 256, %s912, [#allocation3], 128, 128, 8
    $region33: #{tpu_custom_call.1} parent=1 // pred_fallthru
      _
    // Predicated region
    $region34: #{tpu_custom_call.1} parent=1 // pred_check
      _
    $region35: #{tpu_custom_call.1} parent=1 // pred_check_branch
      %919 = sbr.rel (0) target = $region37
    $region36: #{tpu_custom_call.1} parent=1 // pred_region
      %921 = dma.done [#allocation3], 256
    $region37: #{tpu_custom_call.1} parent=1 // pred_fallthru
      _
    %922 = vsyncpa [#allocation3], 1

</llo_original>
